<compile_context>
chip_gen: v7x
topology: tpu7x:2x2x1
jax: 0.10.0
libtpu: 0.0.40
codegen_flags: <defaults>
</compile_context>

<pallas_src>
import functools

import jax
import jax.numpy as jnp
from jax import lax
from jax.experimental import pallas as pl
from jax.experimental.pallas import tpu as pltpu

BN_EPS = 1e-5


# ---------------------------------------------------------------------------
# Pallas kernel: fused (patches @ weights) + bias -> activation
# ---------------------------------------------------------------------------
def _matmul_bias_act_kernel(p_ref, w_ref, b_ref, o_ref, *, act):
    # bf16 x bf16 tile matmul on the MXU with f32 accumulation.
    acc = jnp.dot(p_ref[...], w_ref[...], preferred_element_type=jnp.float32)
    y = acc + b_ref[...]                      # folded eval-mode BatchNorm bias
    if act == "relu":
        y = jnp.maximum(y, 0.0)
    elif act == "tanh":
        y = jnp.tanh(y)
    o_ref[...] = y.astype(o_ref.dtype)


def _pick_tile_m(M, K, elem_bytes=2, limit_bytes=4 * 1024 * 1024):
    # Largest row tile (multiple of 8) dividing M whose bf16 patch block fits
    # ~4 MiB per buffer (double-buffered this stays far inside v7x's 64 MiB).
    for tm in (2048, 1024, 512, 256, 128, 64, 32, 16, 8):
        if M % tm == 0 and tm * K * elem_bytes <= limit_bytes:
            return tm
    return M


def _fused_matmul(patches, wmat, bias, act, out_dtype):
    """(P, M, K) @ (P, K, Cp) + bias -> act, all FLOPs inside Pallas."""
    P, M, K = patches.shape
    Cp = wmat.shape[2]
    tm = _pick_tile_m(M, K)
    tn = 256 if Cp % 256 == 0 else 128        # feed the full 256-wide MXU
    grid = (P, M // tm, Cp // tn)
    return pl.pallas_call(
        functools.partial(_matmul_bias_act_kernel, act=act),
        out_shape=jax.ShapeDtypeStruct((P, M, Cp), out_dtype),
        grid_spec=pltpu.PrefetchScalarGridSpec(
            num_scalar_prefetch=0,
            grid=grid,
            in_specs=[
                pl.BlockSpec((None, tm, K), lambda p, i, j: (p, i, 0)),   # patches
                pl.BlockSpec((None, K, tn), lambda p, i, j: (p, 0, j)),   # weights
                pl.BlockSpec((1, tn), lambda p, i, j: (0, j)),            # BN bias
            ],
            out_specs=pl.BlockSpec((None, tm, tn), lambda p, i, j: (p, i, j)),
        ),
        compiler_params=pltpu.CompilerParams(
            dimension_semantics=("parallel", "parallel", "parallel"),
            # Actual live footprint is only a few MiB; 48 MiB leaves headroom
            # on v5e/v6e (128 MiB physical) and stays inside v7x's 64 MiB.
            vmem_limit_bytes=48 * 1024 * 1024,
        ),
    )(patches, wmat, bias)


# ---------------------------------------------------------------------------
# Eval-mode BatchNorm folding (scale -> weights, bias -> kernel epilogue)
# ---------------------------------------------------------------------------
def _bn_fold(layer, cout):
    if layer["bn"] is not None:
        gamma, beta, mean, var = layer["bn"]
        scale = gamma / jnp.sqrt(var + BN_EPS)
        bias = beta - mean * scale
    else:
        scale = jnp.ones((cout,), jnp.float32)
        bias = jnp.zeros((cout,), jnp.float32)
    return scale, bias


# ---------------------------------------------------------------------------
# Layer 1: ConvTranspose2d(k=4, s=1, p=0) on a 1x1 input == dense projection
#   out[n, ky, kx, co] = sum_ci z[n, ci] * w[ci, co, ky, kx]
# ---------------------------------------------------------------------------
def _convt_project(z_nhwc, layer):
    w = layer["w"]                              # (Cin, Cout, 4, 4) torch layout
    Cin, Cout, Kk, _ = w.shape
    N = z_nhwc.shape[0]
    scale, bias = _bn_fold(layer, Cout)

    wmat = jnp.transpose(w * scale[None, :, None, None], (0, 2, 3, 1))
    wmat = wmat.reshape(Cin, Kk * Kk * Cout)    # columns ordered (ky, kx, co)
    bias_cols = jnp.tile(bias, Kk * Kk).reshape(1, Kk * Kk * Cout)

    Kp = ((Cin + 127) // 128) * 128             # lane-align contraction dim
    zmat = z_nhwc.reshape(N, Cin)
    if Kp != Cin:
        zmat = jnp.pad(zmat, ((0, 0), (0, Kp - Cin)))
        wmat = jnp.pad(wmat, ((0, Kp - Cin), (0, 0)))

    out = _fused_matmul(zmat.astype(jnp.bfloat16)[None],
                        wmat.astype(jnp.bfloat16)[None],
                        bias_cols, layer["act"], jnp.bfloat16)
    return out[0].reshape(N, Kk, Kk, Cout)


# ---------------------------------------------------------------------------
# Layers 2-5: ConvTranspose2d(k=4, s=2, p=1) as 4 sub-pixel stride-1 convs.
# Output phase (ry, rx) at (2my+ry, 2mx+rx) only touches a 2x2 window of the
# (zero-padded-by-1) input with a fixed 2x2 sub-kernel -> K_contract = 4*Cin.
# ---------------------------------------------------------------------------
def _convt_s2(x_nhwc, layer, out_dtype):
    w = layer["w"]                              # (Cin, Cout, 4, 4)
    Cin, Cout, _, _ = w.shape
    N, H, W, _ = x_nhwc.shape
    scale, bias = _bn_fold(layer, Cout)
    w_f = w * scale[None, :, None, None]        # fold BN scale into weights

    Cp = max(128, ((Cout + 127) // 128) * 128)  # lane-aligned output width
    Kc = 4 * Cin

    x_pad = jnp.pad(x_nhwc.astype(jnp.bfloat16),
                    ((0, 0), (1, 1), (1, 1), (0, 0)))

    patch_list, w_list = [], []
    for ry in (0, 1):
        for rx in (0, 1):
            # window offset dy/dx in {0,1}; tap kernel indices per phase:
            ky_idx = [3, 1] if ry == 0 else [2, 0]
            kx_idx = [3, 1] if rx == 0 else [2, 0]
            taps = [x_pad[:, ry + dy: ry + dy + H, rx + dx: rx + dx + W, :]
                    for dy in (0, 1) for dx in (0, 1)]
            patch_list.append(jnp.stack(taps, axis=3).reshape(N * H * W, Kc))
            wsub = w_f[:, :, ky_idx, :][:, :, :, kx_idx]   # (Cin, Cout, 2, 2)
            wsub = jnp.transpose(wsub, (2, 3, 0, 1)).reshape(Kc, Cout)
            if Cp != Cout:
                wsub = jnp.pad(wsub, ((0, 0), (0, Cp - Cout)))
            w_list.append(wsub)

    patches = jnp.stack(patch_list)                       # (4, N*H*W, Kc) bf16
    wmats = jnp.stack(w_list).astype(jnp.bfloat16)        # (4, Kc, Cp)
    bias_p = jnp.pad(bias, (0, Cp - Cout)).reshape(1, Cp)

    out = _fused_matmul(patches, wmats, bias_p, layer["act"], out_dtype)

    # TODO(synk): for the final Cout=3 layer the 128-wide padded writeback is
    # mostly wasted lanes; a Wout*Cout lane repack would shrink it further.
    out = out[:, :, :Cout].reshape(2, 2, N, H, W, Cout)
    out = jnp.transpose(out, (2, 3, 0, 4, 1, 5))          # (N, H, ry, W, rx, C)
    return out.reshape(N, 2 * H, 2 * W, Cout)


def generator_forward(z_nchw, layers):
    x = jnp.transpose(z_nchw, (0, 2, 3, 1)).astype(jnp.bfloat16)  # NCHW->NHWC
    x = _convt_project(x, layers[0])
    for idx in range(1, len(layers)):
        last = idx == len(layers) - 1
        x = _convt_s2(x, layers[idx], jnp.float32 if last else jnp.bfloat16)
    return jnp.transpose(x.astype(jnp.float32), (0, 3, 1, 2))     # NHWC->NCHW


# ---------------------------------------------------------------------------
# Deterministic parameter construction (shapes from the nn.Module __init__)
# ---------------------------------------------------------------------------
def init_generator_params(key):
    cfg = [  # (Cin, Cout, stride, pad, has_bn, act)
        (100, 512, 1, 0, True, "relu"),
        (512, 256, 2, 1, True, "relu"),
        (256, 128, 2, 1, True, "relu"),
        (128, 64, 2, 1, True, "relu"),
        (64, 3, 2, 1, False, "tanh"),
    ]
    layers = []
    for (cin, cout, s, p, has_bn, act) in cfg:
        key, kw, kg, kb, km, kv = jax.random.split(key, 6)
        w = 0.02 * jax.random.normal(kw, (cin, cout, 4, 4), jnp.float32)
        bn = None
        if has_bn:
            gamma = 1.0 + 0.02 * jax.random.normal(kg, (cout,), jnp.float32)
            beta = 0.02 * jax.random.normal(kb, (cout,), jnp.float32)
            mean = 0.1 * jax.random.normal(km, (cout,), jnp.float32)
            var = 1.0 + 0.1 * jnp.abs(jax.random.normal(kv, (cout,), jnp.float32))
            bn = (gamma, beta, mean, var)
        layers.append(dict(w=w, bn=bn, stride=s, pad=p, act=act))
    return layers


# ---------------------------------------------------------------------------
# Pure-JAX f32 reference (same math, via lax.conv_general_dilated)
# ---------------------------------------------------------------------------
def reference_forward(z_nchw, layers):
    x = z_nchw
    for layer in layers:
        w, stride, pad = layer["w"], layer["stride"], layer["pad"]
        Kk = w.shape[2]
        w_oihw = jnp.transpose(w[:, :, ::-1, ::-1], (1, 0, 2, 3))
        x = lax.conv_general_dilated(
            x, w_oihw, window_strides=(1, 1),
            padding=[(Kk - 1 - pad, Kk - 1 - pad)] * 2,
            lhs_dilation=(stride, stride),
            dimension_numbers=("NCHW", "OIHW", "NCHW"))
        if layer["bn"] is not None:
            gamma, beta, mean, var = layer["bn"]
            x = (x - mean[None, :, None, None]) * (
                gamma[None, :, None, None]
                / jnp.sqrt(var[None, :, None, None] + BN_EPS)
            ) + beta[None, :, None, None]
            x = jnp.maximum(x, 0.0)
        if layer["act"] == "tanh":
            x = jnp.tanh(x)
    return x


if __name__ == "__main__":
    key = jax.random.PRNGKey(0)
    pkey, zkey = jax.random.split(key)
    layers = init_generator_params(pkey)

    batch = 2
    z = jax.random.normal(zkey, (batch, 100, 1, 1), jnp.float32)  # NCHW latent

    out = generator_forward(z, layers)
    out = jax.block_until_ready(out)
    assert out.shape == (batch, 3, 64, 64), out.shape

    ref = jax.block_until_ready(reference_forward(z, layers))
    max_err = float(jnp.max(jnp.abs(out - ref)))
    assert max_err < 5e-2, f"max abs error {max_err}"

    print("KERNEL_OK")
</pallas_src>

<mosaic_0001>
module attributes {stable_mosaic.version = 11 : i64} {
  func.func @_matmul_bias_act_kernel(%arg0: i32, %arg1: i32, %arg2: i32, %arg3: memref<1x2x128xbf16, #tpu.memory_space<vmem>>, %arg4: memref<1x128x256xbf16, #tpu.memory_space<vmem>>, %arg5: memref<1x256xf32, #tpu.memory_space<vmem>>, %arg6: memref<1x2x256xbf16, #tpu.memory_space<vmem>>) attributes {dimension_semantics = [#tpu.dimension_semantics<parallel>, #tpu.dimension_semantics<parallel>, #tpu.dimension_semantics<parallel>], iteration_bounds = array<i64: 1, 1, 32>, scalar_prefetch = 0 : i64, scratch_operands = 0 : i64, tpu.core_type = #tpu.core_type<tc>, window_params = [{transform_indices = @transform_0, window_bounds = array<i64: 1, 2, 128>}, {transform_indices = @transform_1, window_bounds = array<i64: 1, 128, 256>}, {transform_indices = @transform_2, window_bounds = array<i64: 1, 256>}, {transform_indices = @transform_3, window_bounds = array<i64: 1, 2, 256>}]} {
    %c0 = arith.constant 0 : index
    %c0_0 = arith.constant 0 : index
    %c0_1 = arith.constant 0 : index
    %0 = vector.load %arg3[%c0, %c0_0, %c0_1] : memref<1x2x128xbf16, #tpu.memory_space<vmem>>, vector<1x2x128xbf16>
    %1 = vector.shape_cast %0 : vector<1x2x128xbf16> to vector<2x128xbf16>
    %c0_2 = arith.constant 0 : index
    %c0_3 = arith.constant 0 : index
    %c0_4 = arith.constant 0 : index
    %2 = vector.load %arg4[%c0_2, %c0_3, %c0_4] : memref<1x128x256xbf16, #tpu.memory_space<vmem>>, vector<1x128x256xbf16>
    %3 = vector.shape_cast %2 : vector<1x128x256xbf16> to vector<128x256xbf16>
    %cst = arith.constant dense<0.000000e+00> : vector<2x256xf32>
    %4 = tpu.matmul %1, %3, %cst {dimension_numbers = #tpu.dot_dimension_numbers<[1], [0], [0], [1], [0, 0, 1, 1], [], []>} : vector<2x128xbf16>, vector<128x256xbf16>, vector<2x256xf32> -> vector<2x256xf32>
    %c0_5 = arith.constant 0 : index
    %c0_6 = arith.constant 0 : index
    %5 = vector.load %arg5[%c0_5, %c0_6] : memref<1x256xf32, #tpu.memory_space<vmem>>, vector<1x256xf32>
    %6 = vector.broadcast %5 : vector<1x256xf32> to vector<2x256xf32>
    %7 = arith.addf %4, %6 : vector<2x256xf32>
    %cst_7 = arith.constant 0.000000e+00 : f32
    %8 = vector.broadcast %cst_7 : f32 to vector<2x256xf32>
    %9 = arith.maximumf %7, %8 : vector<2x256xf32>
    %10 = arith.truncf %9 : vector<2x256xf32> to vector<2x256xbf16>
    %c0_8 = arith.constant 0 : index
    %c0_9 = arith.constant 0 : index
    %c0_10 = arith.constant 0 : index
    %11 = vector.load %arg6[%c0_8, %c0_9, %c0_10] : memref<1x2x256xbf16, #tpu.memory_space<vmem>>, vector<1x2x256xbf16>
    %12 = vector.shape_cast %11 : vector<1x2x256xbf16> to vector<2x256xbf16>
    %13 = vector.shape_cast %10 : vector<2x256xbf16> to vector<1x2x256xbf16>
    tpu.vector_store %arg6[%c0_8, %c0_9, %c0_10], %13 {strides = array<i32>} : memref<1x2x256xbf16, #tpu.memory_space<vmem>>, vector<1x2x256xbf16>,
    return
  }
  func.func @transform_0(%arg0: i32, %arg1: i32, %arg2: i32) -> (i32, i32, i32) {
    %c0_i32 = arith.constant 0 : i32
    %c0_i32_0 = arith.constant 0 : i32
    return %arg0, %arg1, %c0_i32 : i32, i32, i32
  }
  func.func @transform_1(%arg0: i32, %arg1: i32, %arg2: i32) -> (i32, i32, i32) {
    %c0_i32 = arith.constant 0 : i32
    %c0_i32_0 = arith.constant 0 : i32
    return %arg0, %c0_i32, %arg2 : i32, i32, i32
  }
  func.func @transform_2(%arg0: i32, %arg1: i32, %arg2: i32) -> (i32, i32) {
    %c0_i32 = arith.constant 0 : i32
    %c0_i32_0 = arith.constant 0 : i32
    return %c0_i32, %arg2 : i32, i32
  }
  func.func @transform_3(%arg0: i32, %arg1: i32, %arg2: i32) -> (i32, i32, i32) {
    %c0_i32 = arith.constant 0 : i32
    return %arg0, %arg1, %arg2 : i32, i32, i32
  }
}

</mosaic_0001>

<llo_original>
// kernel: tpu_custom_call.1
$region0: #{tpu_custom_call.1}
  #allocation0 [shape = 'u32[]', space=smem, size = 0x4, offset = 0x4, fixed_abs, tag = 'smem constant byte address 0x4 - core index']
  #allocation1 [shape = 'u32[144,128]{1,0:T(1,128)}', space=vmem, size = 0x12000, scoped, tag = 'internal scratch']
  %s0 = inlined_call_operand.hbm [shape: bf16[1,2,128], index: 0, kind: input, shape index: {}]
  %s1 = inlined_call_operand.hbm [shape: bf16[1,128,8192], index: 1, kind: input, shape index: {}]
  %s2 = inlined_call_operand.hbm [shape: f32[1,8192], index: 2, kind: input, shape index: {}]
  %s3 = inlined_call_operand.hbm [shape: bf16[1,2,8192], index: 3, kind: output, shape index: {}]
  %s4 = sld [smem:[#allocation0]]
  $region57: #{tpu_custom_call.1} parent=0
    _
  %s6 = ssub.s32 1, %s4
  %s7 = scalar_select 0, %s6, %s4
  $region1: #{tpu_custom_call.1} parent=0
    #allocation2 [shape = 'u8[512]{0}', space=vmem, size = 0x400, scoped, tag = 'input window, operand 0, single buffered']
    #allocation3 [shape = 's32[2]{0}', space=sflag, size = 0x8, scoped, tag = 'scoped memory for tpu_custom_call.1']
    #allocation4 [shape = 's32[2]{0}', space=sflag, size = 0x8, scoped, tag = 'scoped memory for tpu_custom_call.1']
    #allocation5 [shape = 'u8[131072]{0}', space=vmem, size = 0x20000, scoped, tag = 'input window, operand 1']
    #allocation6 [shape = 's32[2]{0}', space=sflag, size = 0x8, scoped, tag = 'scoped memory for tpu_custom_call.1']
    #allocation7 [shape = 'u8[2048]{0}', space=vmem, size = 0x800, scoped, tag = 'input window, operand 2']
    #allocation8 [shape = 'u8[2048]{0}', space=vmem, size = 0x800, scoped, tag = 'output window, operand 0']
    %8 = vsyncpa [#allocation3], 0
    %9 = vsyncpa [#allocation6], 0
    %s10 = scalar_lea.sflag [#allocation6], 1
    %11 = vsyncpa %s10, 0
    %12 = vsyncpa [#allocation4], 0
    %s13 = scalar_lea.sflag [#allocation4], 1
    %14 = vsyncpa %s13, 0
    loop: start=0, step=1, limit=34
    $region2: #{tpu_custom_call.1} parent=1 // loop_pre_header
      _
    $region3: #{tpu_custom_call.1} parent=1 // loop_header
      %s16 = sphi 0, %s20
      %p17 = scmp.ge.s32.totalorder %s16, 34
      %s23 = sphi 0, %s42
      %s24 = sphi 0, %s38
      %s25 = sphi 0, %s34
      %s26 = sphi 0, %s23
      %s27 = sphi 0, %s24
      %s28 = sphi 0, %s25
      %s29 = sphi 0, %s26
      %s30 = sphi 0, %s27
      %s31 = sphi 0, %s28
      %s47 = sphi 0, %s49
      %s50 = sphi 0, %s47
      %s51 = sphi 0, %s50
      %s67 = sphi 0, %s51
      %s75 = sphi 0, %s77
      %s78 = sphi 0, %s75
      %s79 = sphi 0, %s78
      %s95 = sphi 0, %s79
      %s101 = sphi 0, %s103
      %s104 = sphi 0, %s101
      %s105 = sphi 0, %s104
      %s121 = sphi 0, %s105
      %s131 = sphi 0, %s133
      %s134 = sphi 0, %s131
      %s135 = sphi 0, %s134
      %s151 = sphi 0, %s135
    $region4: #{tpu_custom_call.1} parent=1 // loop_header_branch
      %19 = sbr.rel (%p17) target = $region8
    $region5: #{tpu_custom_call.1} parent=1 // loop_body
      %s21 = ssub.s32 %s16, 1
      %s22 = ssub.s32 %s16, 2
      %s32 = sadd.s32 1, %s25
      %p33 = scmp.ge.s32.totalorder %s32, 32
      %s34 = scalar_select %p33, 0, %s32
      %s35 = sadd.s32 1, %s24
      %s36 = scalar_select %p33, %s35, %s24
      %p37 = scmp.ge.s32.totalorder %s36, 1
      %s38 = scalar_select %p37, 0, %s36
      %s39 = sadd.s32 1, %s23
      %s40 = scalar_select %p37, %s39, %s23
      %p41 = scmp.ge.s32.totalorder %s40, 1
      %s42 = scalar_select %p41, 0, %s40
      %s43 = ssub.s32 %s23, %s42
      %s44 = ssub.s32 %s24, %s38
      %s45 = sor.u32 %s43, %s44
      %p46 = scmp.eq.s32.totalorder %s45, 0
      %s48 = sadd.s32 %s47, 1
      %s49 = scalar_select %p46, %s47, %s48
      %p52 = pneg %p46
      %p53 = scmp.eq.s32.totalorder %s16, 31
      %p54 = por %p52, %p53
      %p55 = scmp.ne.s32.totalorder %s47, %s50
      %p56 = scmp.eq.s32.totalorder %s16, 0
      %p57 = por %p55, %p56
      %p58 = scmp.ne.s32.totalorder %s47, %s50
      %p59 = scmp.eq.s32.totalorder %s21, 31
      %p60 = por %p58, %p59
      %p61 = scmp.ne.s32.totalorder %s50, %s51
      %p62 = scmp.eq.s32.totalorder %s21, 0
      %p63 = por %p61, %p62
      %p64 = scmp.ne.s32.totalorder %s50, %s51
      %p65 = scmp.eq.s32.totalorder %s22, 31
      %p66 = por %p64, %p65
      %p68 = scmp.ne.s32.totalorder %s51, %s67
      %p69 = scmp.eq.s32.totalorder %s22, 0
      %p70 = por %p68, %p69
      %s71 = ssub.s32 %s23, %s42
      %s72 = ssub.s32 %s25, %s34
      %s73 = sor.u32 %s71, %s72
      %p74 = scmp.eq.s32.totalorder %s73, 0
      %s76 = sadd.s32 %s75, 1
      %s77 = scalar_select %p74, %s75, %s76
      %p80 = pneg %p74
      %p81 = scmp.eq.s32.totalorder %s16, 31
      %p82 = por %p80, %p81
      %p83 = scmp.ne.s32.totalorder %s75, %s78
      %p84 = scmp.eq.s32.totalorder %s16, 0
      %p85 = por %p83, %p84
      %p86 = scmp.ne.s32.totalorder %s75, %s78
      %p87 = scmp.eq.s32.totalorder %s21, 31
      %p88 = por %p86, %p87
      %p89 = scmp.ne.s32.totalorder %s78, %s79
      %p90 = scmp.eq.s32.totalorder %s21, 0
      %p91 = por %p89, %p90
      %p92 = scmp.ne.s32.totalorder %s78, %s79
      %p93 = scmp.eq.s32.totalorder %s22, 31
      %p94 = por %p92, %p93
      %p96 = scmp.ne.s32.totalorder %s79, %s95
      %p97 = scmp.eq.s32.totalorder %s22, 0
      %p98 = por %p96, %p97
      %s99 = ssub.s32 %s25, %s34
      %p100 = scmp.eq.s32.totalorder %s99, 0
      %s102 = sadd.s32 %s101, 1
      %s103 = scalar_select %p100, %s101, %s102
      %p106 = pneg %p100
      %p107 = scmp.eq.s32.totalorder %s16, 31
      %p108 = por %p106, %p107
      %p109 = scmp.ne.s32.totalorder %s101, %s104
      %p110 = scmp.eq.s32.totalorder %s16, 0
      %p111 = por %p109, %p110
      %p112 = scmp.ne.s32.totalorder %s101, %s104
      %p113 = scmp.eq.s32.totalorder %s21, 31
      %p114 = por %p112, %p113
      %p115 = scmp.ne.s32.totalorder %s104, %s105
      %p116 = scmp.eq.s32.totalorder %s21, 0
      %p117 = por %p115, %p116
      %p118 = scmp.ne.s32.totalorder %s104, %s105
      %p119 = scmp.eq.s32.totalorder %s22, 31
      %p120 = por %p118, %p119
      %p122 = scmp.ne.s32.totalorder %s105, %s121
      %p123 = scmp.eq.s32.totalorder %s22, 0
      %p124 = por %p122, %p123
      %s125 = ssub.s32 %s23, %s42
      %s126 = ssub.s32 %s24, %s38
      %s127 = sor.u32 %s125, %s126
      %s128 = ssub.s32 %s25, %s34
      %s129 = sor.u32 %s127, %s128
      %p130 = scmp.eq.s32.totalorder %s129, 0
      %s132 = sadd.s32 %s131, 1
      %s133 = scalar_select %p130, %s131, %s132
      %p136 = pneg %p130
      %p137 = scmp.eq.s32.totalorder %s16, 31
      %p138 = por %p136, %p137
      %p139 = scmp.ne.s32.totalorder %s131, %s134
      %p140 = scmp.eq.s32.totalorder %s16, 0
      %p141 = por %p139, %p140
      %p142 = scmp.ne.s32.totalorder %s131, %s134
      %p143 = scmp.eq.s32.totalorder %s21, 31
      %p144 = por %p142, %p143
      %p145 = scmp.ne.s32.totalorder %s134, %s135
      %p146 = scmp.eq.s32.totalorder %s21, 0
      %p147 = por %p145, %p146
      %p148 = scmp.ne.s32.totalorder %s134, %s135
      %p149 = scmp.eq.s32.totalorder %s22, 31
      %p150 = por %p148, %p149
      %p152 = scmp.ne.s32.totalorder %s135, %s151
      %p153 = scmp.eq.s32.totalorder %s22, 0
      %p154 = por %p152, %p153
      %p155 = scmp.le.s32.totalorder 1, %s16
      %p156 = scmp.lt.s32.totalorder %s16, 33
      %p157 = pnand %p155, %p156
      %p158 = pneg %p157
      // Predicated region
      $region9: #{tpu_custom_call.1} parent=5 // pred_check
        _
      $region10: #{tpu_custom_call.1} parent=5 // pred_check_branch
        %160 = sbr.rel (%p157) target = $region12
      $region11: #{tpu_custom_call.1} parent=5 // pred_region
        %s161 = ssub.s32 %s16, 1
        // Predicated region
        $region13: #{tpu_custom_call.1} parent=11 // pred_check
          %p162 = pneg %p63
        $region14: #{tpu_custom_call.1} parent=11 // pred_check_branch
          %164 = sbr.rel (%p162) target = $region16
        $region15: #{tpu_custom_call.1} parent=11 // pred_region
          %s166 = ssub.s32 16, 16
          %167 = vsyncadd [#allocation3], %s166
          %s168 = sadd.s32 %s27, %s26
          %s169 = smul.addr %s168, 16
          %s170 = scalar_lea.hbm %s0, %s169
          %s172 = sshll.u32 [#allocation2], 4
          %s173 = int_to_ptr.vmem [resolvable:$true] %s172
          %175 = dma.hbm_to_vmem [thread:$0]  %s170, 16, %s173, [#allocation3]
        $region16: #{tpu_custom_call.1} parent=11 // pred_fallthru
          _
      $region12: #{tpu_custom_call.1} parent=5 // pred_fallthru
        _
      %p176 = scmp.lt.s32.totalorder %s16, 32
      // Predicated region
      $region17: #{tpu_custom_call.1} parent=5 // pred_check
        %p177 = pneg %p176
      $region18: #{tpu_custom_call.1} parent=5 // pred_check_branch
        %179 = sbr.rel (%p177) target = $region20
      $region19: #{tpu_custom_call.1} parent=5 // pred_region
        // Predicated region
        $region21: #{tpu_custom_call.1} parent=19 // pred_check
          %p180 = pneg %p85
        $region22: #{tpu_custom_call.1} parent=19 // pred_check_branch
          %182 = sbr.rel (%p180) target = $region24
        $region23: #{tpu_custom_call.1} parent=19 // pred_region
          %s183 = sand.u32 %s16, 1
          %s184 = scalar_lea.sflag [#allocation6], %s183
          %s185 = sand.u32 %s75, 1
          %s186 = smul.addr %s185, 128
          %s187 = scalar_lea.vmem [#allocation5], %s186
          %s188 = smul.u32 2, %s25
          %s190 = ssub.s32 2048, 2048
          %191 = vsyncadd %s184, %s190
          %s192 = smul.addr %s23, 1024
          %s193 = sadd.s32 %s188, %s192
          %s194 = smul.addr %s193, 64
          %s195 = scalar_lea.hbm %s1, %s194
          %s196 = sshll.u32 %s187, 4
          %s197 = int_to_ptr.vmem [resolvable:$true] %s196
          %202 = dma.hbm_to_vmem [thread:$0]  %s195, 2048, %s197, %s184, 4096, 128, 8
        $region24: #{tpu_custom_call.1} parent=19 // pred_fallthru
          _
        // Predicated region
        $region25: #{tpu_custom_call.1} parent=19 // pred_check
          %p203 = pneg %p111
        $region26: #{tpu_custom_call.1} parent=19 // pred_check_branch
          %205 = sbr.rel (%p203) target = $region28
        $region27: #{tpu_custom_call.1} parent=19 // pred_region
          %s206 = sand.u32 %s16, 1
          %s207 = scalar_lea.sflag [#allocation6], %s206
          %s208 = sand.u32 %s101, 1
          %s209 = smul.addr %s208, 2
          %s210 = scalar_lea.vmem [#allocation7], %s209
          %s211 = smul.u32 2, %s25
          %s213 = ssub.s32 32, 32
          %214 = vsyncadd %s207, %s213
          %s215 = smul.addr %s211, 16
          %s216 = scalar_lea.hbm %s2, %s215
          %s218 = sshll.u32 %s210, 4
          %s219 = int_to_ptr.vmem [resolvable:$true] %s218
          %221 = dma.hbm_to_vmem [thread:$0]  %s216, 32, %s219, %s207
        $region28: #{tpu_custom_call.1} parent=19 // pred_fallthru
          _
      $region20: #{tpu_custom_call.1} parent=5 // pred_fallthru
        _
      %p222 = scmp.le.s32.totalorder 1, %s16
      %p223 = scmp.lt.s32.totalorder %s16, 33
      %p224 = pnand %p222, %p223
      %p225 = pneg %p224
      // Predicated region
      $region29: #{tpu_custom_call.1} parent=5 // pred_check
        _
      $region30: #{tpu_custom_call.1} parent=5 // pred_check_branch
        %227 = sbr.rel (%p224) target = $region32
      $region31: #{tpu_custom_call.1} parent=5 // pred_region
        %s228 = ssub.s32 %s16, 1
        // Predicated region
        $region33: #{tpu_custom_call.1} parent=31 // pred_check
          %p229 = pneg %p63
        $region34: #{tpu_custom_call.1} parent=31 // pred_check_branch
          %231 = sbr.rel (%p229) target = $region36
        $region35: #{tpu_custom_call.1} parent=31 // pred_region
          %232 = dma.done [#allocation3], 16
        $region36: #{tpu_custom_call.1} parent=31 // pred_fallthru
          _
        %s233 = sand.u32 %s21, 1
        %s234 = scalar_lea.sflag [#allocation6], %s233
        %s235 = sand.u32 %s78, 1
        %s236 = smul.addr %s235, 128
        %s237 = scalar_lea.vmem [#allocation5], %s236
        // Predicated region
        $region37: #{tpu_custom_call.1} parent=31 // pred_check
          %p238 = pneg %p91
        $region38: #{tpu_custom_call.1} parent=31 // pred_check_branch
          %240 = sbr.rel (%p238) target = $region40
        $region39: #{tpu_custom_call.1} parent=31 // pred_region
          %241 = dma.done %s234, 2048
        $region40: #{tpu_custom_call.1} parent=31 // pred_fallthru
          _
        %s242 = sand.u32 %s21, 1
        %s243 = scalar_lea.sflag [#allocation6], %s242
        %s244 = sand.u32 %s104, 1
        %s245 = smul.addr %s244, 2
        %s246 = scalar_lea.vmem [#allocation7], %s245
        // Predicated region
        $region41: #{tpu_custom_call.1} parent=31 // pred_check
          %p247 = pneg %p117
        $region42: #{tpu_custom_call.1} parent=31 // pred_check_branch
          %249 = sbr.rel (%p247) target = $region44
        $region43: #{tpu_custom_call.1} parent=31 // pred_region
          %250 = dma.done %s243, 32
        $region44: #{tpu_custom_call.1} parent=31 // pred_fallthru
          _
        %p251 = pneg %p63
        %p252 = pneg %p60
        %s253 = sand.u32 %s21, 1
        %s254 = scalar_lea.sflag [#allocation6], %s253
        %s255 = sand.u32 %s78, 1
        %s256 = smul.addr %s255, 128
        %s257 = scalar_lea.vmem [#allocation5], %s256
        %p258 = pneg %p91
        %p259 = pneg %p88
        %s260 = sand.u32 %s21, 1
        %s261 = scalar_lea.sflag [#allocation6], %s260
        %s262 = sand.u32 %s104, 1
        %s263 = smul.addr %s262, 2
        %s264 = scalar_lea.vmem [#allocation7], %s263
        %p265 = pneg %p117
        %p266 = pneg %p114
        %p267 = pneg %p147
        %p268 = pneg %p144
        %s269 = sand.u32 %s134, 1
        %s270 = scalar_lea.sflag [#allocation4], %s269
        %s271 = sand.u32 %s134, 1
        %s272 = smul.addr %s271, 2
        %s273 = scalar_lea.vmem [#allocation8], %s272
        %s274 = smul.u32 2, %s28
        %s275 = smul.u32 2, %s28
        %s276 = smul.u32 2, %s28
        %v278 = vld [vmem:[#allocation2] sm:$0x1]
        %v279 = vld [vmem:[%s237] sm:$0xff]
        %v280 = vld [vmem:[%s237 + $0x8] sm:$0xff]
        %v281 = vld [vmem:[%s237 + $0x10] sm:$0xff]
        %v282 = vld [vmem:[%s237 + $0x18] sm:$0xff]
        %v283 = vld [vmem:[%s237 + $0x20] sm:$0xff]
        %v284 = vld [vmem:[%s237 + $0x28] sm:$0xff]
        %v285 = vld [vmem:[%s237 + $0x30] sm:$0xff]
        %v286 = vld [vmem:[%s237 + $0x38] sm:$0xff]
        %v287 = vld [vmem:[%s237 + $0x40] sm:$0xff]
        %v288 = vld [vmem:[%s237 + $0x48] sm:$0xff]
        %v289 = vld [vmem:[%s237 + $0x50] sm:$0xff]
        %v290 = vld [vmem:[%s237 + $0x58] sm:$0xff]
        %v291 = vld [vmem:[%s237 + $0x60] sm:$0xff]
        %v292 = vld [vmem:[%s237 + $0x68] sm:$0xff]
        %v293 = vld [vmem:[%s237 + $0x70] sm:$0xff]
        %v294 = vld [vmem:[%s237 + $0x78] sm:$0xff]
        %v295 = vld [vmem:[%s246] sm:$0x3]
        %v297 = vlaneseq
        %v298 = vshrl.u32 %v297, 7
        %v299 = vsub.s32 0, %v298
        %v300 = vrot.slane %v295, %v299
        %v301 = vlaneseq
        %v302 = vshrl.u32 %v301, 7
        %v303 = vsub.s32 1, %v302
        %v304 = vrot.slane %v295, %v303
        %v323 = vunpack.c.l.b16 %v279
        %v324 = vunpack.c.h.b16 %v279
        %v325 = vunpack.c.l.b16 %v280
        %v326 = vunpack.c.h.b16 %v280
        %v327 = vunpack.c.l.b16 %v281
        %v328 = vunpack.c.h.b16 %v281
        %v329 = vunpack.c.l.b16 %v282
        %v330 = vunpack.c.h.b16 %v282
        %v331 = vunpack.c.l.b16 %v283
        %v332 = vunpack.c.h.b16 %v283
        %v333 = vunpack.c.l.b16 %v284
        %v334 = vunpack.c.h.b16 %v284
        %v335 = vunpack.c.l.b16 %v285
        %v336 = vunpack.c.h.b16 %v285
        %v337 = vunpack.c.l.b16 %v286
        %v338 = vunpack.c.h.b16 %v286
        %v339 = vunpack.c.l.b16 %v287
        %v340 = vunpack.c.h.b16 %v287
        %v341 = vunpack.c.l.b16 %v288
        %v342 = vunpack.c.h.b16 %v288
        %v343 = vunpack.c.l.b16 %v289
        %v344 = vunpack.c.h.b16 %v289
        %v345 = vunpack.c.l.b16 %v290
        %v346 = vunpack.c.h.b16 %v290
        %v347 = vunpack.c.l.b16 %v291
        %v348 = vunpack.c.h.b16 %v291
        %v349 = vunpack.c.l.b16 %v292
        %v350 = vunpack.c.h.b16 %v292
        %v351 = vunpack.c.l.b16 %v293
        %v352 = vunpack.c.h.b16 %v293
        %v353 = vunpack.c.l.b16 %v294
        %v354 = vunpack.c.h.b16 %v294
        %v355 = vpack.c.b16 %v325, %v323
        %v356 = vpack.c.b16 %v326, %v324
        %v357 = vpack.c.b16 %v329, %v327
        %v358 = vpack.c.b16 %v330, %v328
        %v359 = vpack.c.b16 %v333, %v331
        %v360 = vpack.c.b16 %v334, %v332
        %v361 = vpack.c.b16 %v337, %v335
        %v362 = vpack.c.b16 %v338, %v336
        %v363 = vpack.c.b16 %v341, %v339
        %v364 = vpack.c.b16 %v342, %v340
        %v365 = vpack.c.b16 %v345, %v343
        %v366 = vpack.c.b16 %v346, %v344
        %v367 = vpack.c.b16 %v349, %v347
        %v368 = vpack.c.b16 %v350, %v348
        %v369 = vpack.c.b16 %v353, %v351
        %v370 = vpack.c.b16 %v354, %v352
        %387 = vmatprep.subr.bf16.mxu0 %v356
        %388 = vmatpush1.bf16.msra.mxu0 %v355
        %389 = vmatprep.subr.bf16.mxu0 %v358
        %390 = vmatpush1.bf16.msra.mxu0 %v357
        %391 = vmatprep.subr.bf16.mxu0 %v360
        %392 = vmatpush1.bf16.msra.mxu0 %v359
        %393 = vmatprep.subr.bf16.mxu0 %v362
        %394 = vmatpush1.bf16.msra.mxu0 %v361
        %395 = vmatprep.subr.bf16.mxu0 %v364
        %396 = vmatpush1.bf16.msra.mxu0 %v363
        %397 = vmatprep.subr.bf16.mxu0 %v366
        %398 = vmatpush1.bf16.msra.mxu0 %v365
        %399 = vmatprep.subr.bf16.mxu0 %v368
        %400 = vmatpush1.bf16.msra.mxu0 %v367
        %401 = vmatprep.subr.bf16.mxu0 %v370
        %402 = vmatpush1.bf16.msra.mxu0 %v369
        %403 = vmatprep.subr.bf16.mxu0 0
        %404 = vmatpush1.bf16.msra.mxu0 0
        %405 = vmatprep.subr.bf16.mxu0 0
        %406 = vmatpush1.bf16.msra.mxu0 0
        %407 = vmatprep.subr.bf16.mxu0 0
        %408 = vmatpush1.bf16.msra.mxu0 0
        %409 = vmatprep.subr.bf16.mxu0 0
        %410 = vmatpush1.bf16.msra.mxu0 0
        %411 = vmatprep.subr.bf16.mxu0 0
        %412 = vmatpush1.bf16.msra.mxu0 0
        %413 = vmatprep.subr.bf16.mxu0 0
        %414 = vmatpush1.bf16.msra.mxu0 0
        %415 = vmatprep.subr.bf16.mxu0 0
        %416 = vmatpush1.bf16.msra.mxu0 0
        %417 = vmatprep.subr.bf16.mxu0 0
        %418 = vmatpush1.bf16.msra.mxu0 0
        %419 = vmatprep.mubr.bf16.mxu0 0
        %420 = vmatmul.mubr.bf16.gmra.mrb[0].mxu0 %v278
        %v421 = vpop.f32.mrb[0].mxu0
        %v422 = vadd.f32 %v300, %v421
        %v423 = vpop.f32.mrb[0].mxu0
        %v424 = vadd.f32 %v304, %v423
        %v425 = vpop.f32.mrb[0].mxu0
        %v426 = vpop.f32.mrb[0].mxu0
        %427 = vdwg.mxu0
        %v428 = vmax.f32 %v422, 0.0
        %v429 = vmax.f32 %v424, 0.0
        %v430 = vpack.c.bf16 %v428, %v428
        %v431 = vpack.c.bf16 %v429, %v429
        %v434 = vcombine.low %v430, %v431
        %v436 = vunpack.c.l.s4 1966171168
        %v437 = vunpack.c.0.s8 %v436
        %v438 = vlaneseq
        %v439 = vshrl.u32 %v438, 7
        %v440 = vsub.s32 %v437, %v439
        %v441 = vrot.slane %v434, %v440
        %v443 = vunpack.c.l.s4 1966171168
        %v444 = vunpack.c.0.s8 %v443
        %v445 = vlaneseq
        %v446 = vshrl.u32 %v445, 7
        %v447 = vsub.s32 %v444, %v446
        %v448 = vrot.slane %v441, %v447
        %450 = vst [vmem:[%s273] sm:$0x3] %v448
        %s451 = sand.u32 %s134, 1
        %s452 = scalar_lea.sflag [#allocation4], %s451
        %s453 = sand.u32 %s134, 1
        %s454 = smul.addr %s453, 2
        %s455 = scalar_lea.vmem [#allocation8], %s454
        // Predicated region
        $region45: #{tpu_custom_call.1} parent=31 // pred_check
          %p456 = pneg %p144
        $region46: #{tpu_custom_call.1} parent=31 // pred_check_branch
          %458 = sbr.rel (%p456) target = $region48
        $region47: #{tpu_custom_call.1} parent=31 // pred_region
          %s459 = smul.u32 2, %s28
          %s461 = ssub.s32 32, 32
          %462 = vsyncadd %s452, %s461
          %s463 = smul.addr %s27, 64
          %s464 = sadd.s32 %s459, %s463
          %s465 = smul.addr %s26, 64
          %s466 = sadd.s32 %s464, %s465
          %s467 = smul.addr %s466, 16
          %s468 = scalar_lea.hbm %s3, %s467
          %s470 = sshll.u32 %s455, 4
          %s471 = int_to_ptr.vmem [resolvable:$true] %s470
          %473 = dma.vmem_to_hbm [thread:$0]  %s471, 32, %s468, %s452
        $region48: #{tpu_custom_call.1} parent=31 // pred_fallthru
          _
      $region32: #{tpu_custom_call.1} parent=5 // pred_fallthru
        _
      %p474 = scmp.le.s32.totalorder 2, %s16
      // Predicated region
      $region49: #{tpu_custom_call.1} parent=5 // pred_check
        %p475 = pneg %p474
      $region50: #{tpu_custom_call.1} parent=5 // pred_check_branch
        %477 = sbr.rel (%p475) target = $region52
      $region51: #{tpu_custom_call.1} parent=5 // pred_region
        %s478 = ssub.s32 %s16, 2
        // Predicated region
        $region53: #{tpu_custom_call.1} parent=51 // pred_check
          %p479 = pneg %p150
        $region54: #{tpu_custom_call.1} parent=51 // pred_check_branch
          %481 = sbr.rel (%p479) target = $region56
        $region55: #{tpu_custom_call.1} parent=51 // pred_region
          %s482 = sand.u32 %s135, 1
          %s483 = scalar_lea.sflag [#allocation4], %s482
          %s484 = sand.u32 %s135, 1
          %s485 = smul.addr %s484, 2
          %s486 = scalar_lea.vmem [#allocation8], %s485
          %487 = dma.done %s483, 32
        $region56: #{tpu_custom_call.1} parent=51 // pred_fallthru
          _
      $region52: #{tpu_custom_call.1} parent=5 // pred_fallthru
        _
    $region6: #{tpu_custom_call.1} parent=1 // loop_footer
      %s20 = sadd.s32 1, %s16
    $region7: #{tpu_custom_call.1} parent=1 // loop_footer_branch
      %15 = sbr.rel target = $region3
    $region8: #{tpu_custom_call.1} parent=1 // loop_exit
      _
    %488 = vsyncpa [#allocation3], 1
    %s489 = scalar_lea.sflag [#allocation3], 1
    %490 = vsyncpa %s489, 1
    %491 = vsyncpa [#allocation6], 1
    %s492 = scalar_lea.sflag [#allocation6], 1
    %493 = vsyncpa %s492, 1
    %494 = vsyncpa [#allocation4], 1
    %s495 = scalar_lea.sflag [#allocation4], 1
    %496 = vsyncpa %s495, 1

</llo_original>
